<compile_context>
chip_gen: v7x
topology: tpu7x:2x2x1
jax: 0.10.0
libtpu: 0.0.40
codegen_flags: <defaults>
</compile_context>

<pallas_src>
import jax
import jax.numpy as jnp
from jax.experimental import pallas as pl
from jax.experimental.pallas import tpu as pltpu

EMB_DIMS = 32     # emb_dims
BATCH = 2
N_POINTS = 16
N_TASKS = 6
BN_EPS = 1e-5

_LAYER_ORDER = ("w1", "w2", "w3", "w4", "r1", "r2", "r3", "ew")
_BIAS_ROW = {name: i for i, name in enumerate(_LAYER_ORDER)}


def _round8(x):
    return (x + 7) // 8 * 8


def _param_layout(E):
    """Row offset / (in,out) dims of each weight inside the packed (rows,128) slab."""
    dims = [
        ("w1", 2 * E,      E // 2),
        ("w2", E // 2,     E // 4),
        ("w3", E // 4,     E // 8),
        ("w4", E // 8,     E // 8),
        ("r1", E // 8 + 6, 128),
        ("r2", 128,        64),
        ("r3", 64,         48),
        ("ew", 48,         4 * N_TASKS),
    ]
    layout, off = {}, 0
    for name, rin, rout in dims:
        layout[name] = (off, rin, rout)
        off = _round8(off + rin)
    return layout, off


def _softplus(x):
    # numerically stable softplus, matches torch.nn.functional.softplus
    return jnp.maximum(x, 0.0) + jnp.log(1.0 + jnp.exp(-jnp.abs(x)))


# ---------------------------------------------------------------------------
# Pallas kernel: whole forward pass (max-pool, MLPs, evidential head)
# ---------------------------------------------------------------------------
def make_kernel(E):
    layout, _ = _param_layout(E)

    def kernel(emb_ref, rt_ref, w_ref, b_ref, out_ref):
        f32 = jnp.float32

        def lin(x, name):
            off, rin, rout = layout[name]
            row = _BIAS_ROW[name]
            w = w_ref[off:off + rin, :rout]
            b = b_ref[row:row + 1, :rout]
            return jnp.dot(x, w, preferred_element_type=f32) + b

        # global max-pool over points (points live on the sublane axis)
        emb = jnp.max(emb_ref[...], axis=1)                 # (B, 2E)

        # --- pose_regressor (BN folded into weights) -------------------------
        h = jnp.maximum(lin(emb, "w1"), 0.0)
        h = jnp.maximum(lin(h, "w2"), 0.0)
        h = jnp.maximum(lin(h, "w3"), 0.0)
        trans1 = lin(h, "w4")                               # (B, E//8)

        # --- regressor on concat(trans1, r_euler, trans) ----------------------
        transf = jnp.concatenate([trans1, rt_ref[...]], axis=-1)   # (B, E//8 + 6)
        g = jnp.maximum(lin(transf, "r1"), 0.0)
        g = jnp.maximum(lin(g, "r2"), 0.0)
        reg = lin(g, "r3")                                  # (B, 48)

        # --- DenseNormalGamma head: one fused (48, 24) matmul ------------------
        ev = lin(reg, "ew")                                 # (B, 24)
        sp = _softplus(ev)
        lane = jax.lax.broadcasted_iota(jnp.int32, ev.shape, 1)
        res = jnp.where(lane < N_TASKS, ev, sp)             # gamma stays linear
        res = jnp.where((lane >= 2 * N_TASKS) & (lane < 3 * N_TASKS),
                        res + 1.0, res)                     # alpha += 1
        out_ref[...] = res                                  # [gamma|nu|alpha|beta]

    return kernel


# ---------------------------------------------------------------------------
# Glue: euler angles (tiny), parameter setup, pallas_call wrapper
# ---------------------------------------------------------------------------
def matrix_to_euler_angles_xyz(M):
    # pytorch3d matrix_to_euler_angles(rot, convention='XYZ')
    # TODO(synk): asin/atan2 on a (B,3,3) matrix is tiny glue; kept in plain JAX.
    ax = jnp.arctan2(-M[:, 1, 2], M[:, 2, 2])
    ay = jnp.arcsin(jnp.clip(M[:, 0, 2], -1.0, 1.0))
    az = jnp.arctan2(-M[:, 0, 1], M[:, 0, 0])
    return jnp.stack([ax, ay, az], axis=-1)


def init_linear(key, fan_in, fan_out):
    kw, kb = jax.random.split(key)
    bound = 1.0 / jnp.sqrt(jnp.float32(fan_in))
    w = jax.random.uniform(kw, (fan_out, fan_in), jnp.float32, -bound, bound)
    b = jax.random.uniform(kb, (fan_out,), jnp.float32, -bound, bound)
    return w, b


def init_params(key, emb_dims):
    E = emb_dims
    ks = jax.random.split(key, 8)
    P = {}
    P['p_w1'], P['p_b1'] = init_linear(ks[0], 2 * E, E // 2)
    P['p_w2'], P['p_b2'] = init_linear(ks[1], E // 2, E // 4)
    P['p_w3'], P['p_b3'] = init_linear(ks[2], E // 4, E // 8)
    P['p_w4'], P['p_b4'] = init_linear(ks[3], E // 8, E // 8)
    P['r_w1'], P['r_b1'] = init_linear(ks[4], E // 8 + 6, 128)
    P['r_w2'], P['r_b2'] = init_linear(ks[5], 128, 64)
    P['r_w3'], P['r_b3'] = init_linear(ks[6], 64, 48)
    P['e_w'],  P['e_b']  = init_linear(ks[7], 48, 4 * N_TASKS)
    return P


def kernel_params(P, emb_dims, eps=BN_EPS):
    """Pack all weights/biases into two lane-dense slabs; fold eval-mode BN."""
    E = emb_dims
    layout, total_rows = _param_layout(E)
    sc = (1.0 + eps) ** -0.5   # BN eval with mean=0, var=1, weight=1, bias=0

    entries = {
        "w1": (P['p_w1'], P['p_b1'], True),
        "w2": (P['p_w2'], P['p_b2'], True),
        "w3": (P['p_w3'], P['p_b3'], True),
        "w4": (P['p_w4'], P['p_b4'], False),
        "r1": (P['r_w1'], P['r_b1'], True),
        "r2": (P['r_w2'], P['r_b2'], True),
        "r3": (P['r_w3'], P['r_b3'], False),
        "ew": (P['e_w'],  P['e_b'],  False),
    }

    w_slab = jnp.zeros((total_rows, 128), jnp.float32)
    b_slab = jnp.zeros((8, 128), jnp.float32)
    for name in _LAYER_ORDER:
        w, b, has_bn = entries[name]
        scale = sc if has_bn else 1.0
        wt = jnp.transpose(w) * scale          # (in, out), BN folded
        bt = b * scale
        off, rin, rout = layout[name]
        w_slab = w_slab.at[off:off + rin, :rout].set(wt)
        b_slab = b_slab.at[_BIAS_ROW[name], :rout].set(bt)
    return w_slab, b_slab


def registration_evidence(src_emb, tgt_emb, rot, trans, w_slab, b_slab,
                          emb_dims=EMB_DIMS):
    B = src_emb.shape[0]
    # cat(src,tgt,dim=1) done in the wrapper; layout (B, N_points, 2E) so the
    # channel axis is lane-contiguous and the max-pool reduces over sublanes.
    emb = jnp.transpose(jnp.concatenate([src_emb, tgt_emb], axis=1), (0, 2, 1))
    r_euler = matrix_to_euler_angles_xyz(rot)
    rt = jnp.concatenate([r_euler, trans], axis=-1)          # (B, 6)

    vmem = pl.BlockSpec(memory_space=pltpu.MemorySpace.VMEM)
    out2d = pl.pallas_call(
        make_kernel(emb_dims),
        out_shape=jax.ShapeDtypeStruct((B, 4 * N_TASKS), jnp.float32),
        in_specs=[vmem, vmem, vmem, vmem],
        out_specs=vmem,
    )(emb, rt, w_slab, b_slab)

    # (B, 24) -> (4, B, 6) to match torch.stack([gamma, nu, alpha, beta])
    return jnp.transpose(out2d.reshape(B, 4, N_TASKS), (1, 0, 2))


# ---------------------------------------------------------------------------
# Pure-JAX reference (mirrors the PyTorch forward, eval-mode BN)
# ---------------------------------------------------------------------------
def reference_forward(src_emb, tgt_emb, rot, trans, P, eps=BN_EPS):
    lin = lambda x, w, b: x @ w.T + b
    bn = lambda x: x / jnp.sqrt(1.0 + eps)
    emb = jnp.concatenate([src_emb, tgt_emb], axis=1).max(axis=-1)
    h = jax.nn.relu(bn(lin(emb, P['p_w1'], P['p_b1'])))
    h = jax.nn.relu(bn(lin(h, P['p_w2'], P['p_b2'])))
    h = jax.nn.relu(bn(lin(h, P['p_w3'], P['p_b3'])))
    trans1 = lin(h, P['p_w4'], P['p_b4'])
    r_euler = matrix_to_euler_angles_xyz(rot)
    transf = jnp.concatenate([trans1, r_euler, trans], axis=1)
    g = jax.nn.relu(bn(lin(transf, P['r_w1'], P['r_b1'])))
    g = jax.nn.relu(bn(lin(g, P['r_w2'], P['r_b2'])))
    reg = lin(g, P['r_w3'], P['r_b3'])
    x = lin(reg, P['e_w'], P['e_b'])
    gamma, lognu, logalpha, logbeta = jnp.split(x, 4, axis=1)
    return jnp.stack([gamma, jax.nn.softplus(lognu),
                      jax.nn.softplus(logalpha) + 1.0, jax.nn.softplus(logbeta)])


def _rot_from_angles(a):
    def rx(t):
        c, s = jnp.cos(t), jnp.sin(t); o, z = jnp.ones_like(t), jnp.zeros_like(t)
        return jnp.stack([jnp.stack([o, z, z], -1),
                          jnp.stack([z, c, -s], -1),
                          jnp.stack([z, s, c], -1)], -2)
    def ry(t):
        c, s = jnp.cos(t), jnp.sin(t); o, z = jnp.ones_like(t), jnp.zeros_like(t)
        return jnp.stack([jnp.stack([c, z, s], -1),
                          jnp.stack([z, o, z], -1),
                          jnp.stack([-s, z, c], -1)], -2)
    def rz(t):
        c, s = jnp.cos(t), jnp.sin(t); o, z = jnp.ones_like(t), jnp.zeros_like(t)
        return jnp.stack([jnp.stack([c, -s, z], -1),
                          jnp.stack([s, c, z], -1),
                          jnp.stack([z, z, o], -1)], -2)
    return rx(a[:, 0]) @ ry(a[:, 1]) @ rz(a[:, 2])


if __name__ == "__main__":
    key = jax.random.PRNGKey(0)
    k_src, k_tgt, k_ang, k_trans, k_param = jax.random.split(key, 5)

    src = jax.random.normal(k_src, (BATCH, EMB_DIMS, N_POINTS), jnp.float32)
    tgt = jax.random.normal(k_tgt, (BATCH, EMB_DIMS, N_POINTS), jnp.float32)
    angles = jax.random.uniform(k_ang, (BATCH, 3), jnp.float32, -1.0, 1.0)
    rot = _rot_from_angles(angles)                      # valid rotation matrices (B,3,3)
    trans = jax.random.normal(k_trans, (BATCH, 3), jnp.float32)

    P = init_params(k_param, EMB_DIMS)
    w_slab, b_slab = kernel_params(P, EMB_DIMS)

    out = registration_evidence(src, tgt, rot, trans, w_slab, b_slab, EMB_DIMS)
    out = jax.block_until_ready(out)

    ref = reference_forward(src, tgt, rot, trans, P)
    assert out.shape == (4, BATCH, N_TASKS)
    if not jnp.allclose(out, ref, atol=1e-3, rtol=1e-3):
        raise AssertionError("Pallas kernel output mismatch vs reference")
    print("KERNEL_OK")
</pallas_src>

<mosaic_0001>
module attributes {stable_mosaic.version = 11 : i64} {
  func.func @kernel(%arg0: memref<2x16x64xf32, #tpu.memory_space<vmem>>, %arg1: memref<2x6xf32, #tpu.memory_space<vmem>>, %arg2: memref<352x128xf32, #tpu.memory_space<vmem>>, %arg3: memref<8x128xf32, #tpu.memory_space<vmem>>, %arg4: memref<2x24xf32, #tpu.memory_space<vmem>>) attributes {dimension_semantics = [], scalar_prefetch = 0 : i64, scratch_operands = 0 : i64, tpu.core_type = #tpu.core_type<tc>} {
    %c0 = arith.constant 0 : index
    %c0_0 = arith.constant 0 : index
    %c0_1 = arith.constant 0 : index
    %0 = vector.load %arg0[%c0, %c0_0, %c0_1] : memref<2x16x64xf32, #tpu.memory_space<vmem>>, vector<2x16x64xf32>
    %cst = arith.constant dense<0xFF800000> : vector<2x64xf32>
    %1 = vector.multi_reduction <maximumf>, %0, %cst [1] : vector<2x16x64xf32> to vector<2x64xf32>
    %c0_2 = arith.constant 0 : index
    %c0_3 = arith.constant 0 : index
    %2 = vector.load %arg2[%c0_2, %c0_3] : memref<352x128xf32, #tpu.memory_space<vmem>>, vector<64x16xf32>
    %c0_4 = arith.constant 0 : index
    %c0_5 = arith.constant 0 : index
    %3 = vector.load %arg3[%c0_4, %c0_5] : memref<8x128xf32, #tpu.memory_space<vmem>>, vector<1x16xf32>
    %cst_6 = arith.constant dense<0.000000e+00> : vector<2x16xf32>
    %4 = tpu.matmul %1, %2, %cst_6 {dimension_numbers = #tpu.dot_dimension_numbers<[1], [0], [0], [1], [0, 0, 1, 1], [], []>} : vector<2x64xf32>, vector<64x16xf32>, vector<2x16xf32> -> vector<2x16xf32>
    %5 = vector.broadcast %3 : vector<1x16xf32> to vector<2x16xf32>
    %6 = arith.addf %4, %5 : vector<2x16xf32>
    %cst_7 = arith.constant 0.000000e+00 : f32
    %7 = vector.broadcast %cst_7 : f32 to vector<2x16xf32>
    %8 = arith.maximumf %6, %7 : vector<2x16xf32>
    %c64 = arith.constant 64 : index
    %c0_8 = arith.constant 0 : index
    %9 = vector.load %arg2[%c64, %c0_8] : memref<352x128xf32, #tpu.memory_space<vmem>>, vector<16x8xf32>
    %c1 = arith.constant 1 : index
    %c0_9 = arith.constant 0 : index
    %10 = vector.load %arg3[%c1, %c0_9] : memref<8x128xf32, #tpu.memory_space<vmem>>, vector<1x8xf32>
    %cst_10 = arith.constant dense<0.000000e+00> : vector<2x8xf32>
    %11 = tpu.matmul %8, %9, %cst_10 {dimension_numbers = #tpu.dot_dimension_numbers<[1], [0], [0], [1], [0, 0, 1, 1], [], []>} : vector<2x16xf32>, vector<16x8xf32>, vector<2x8xf32> -> vector<2x8xf32>
    %12 = vector.broadcast %10 : vector<1x8xf32> to vector<2x8xf32>
    %13 = arith.addf %11, %12 : vector<2x8xf32>
    %cst_11 = arith.constant 0.000000e+00 : f32
    %14 = vector.broadcast %cst_11 : f32 to vector<2x8xf32>
    %15 = arith.maximumf %13, %14 : vector<2x8xf32>
    %c80 = arith.constant 80 : index
    %c0_12 = arith.constant 0 : index
    %16 = vector.load %arg2[%c80, %c0_12] : memref<352x128xf32, #tpu.memory_space<vmem>>, vector<8x4xf32>
    %c2 = arith.constant 2 : index
    %c0_13 = arith.constant 0 : index
    %17 = vector.load %arg3[%c2, %c0_13] : memref<8x128xf32, #tpu.memory_space<vmem>>, vector<1x4xf32>
    %cst_14 = arith.constant dense<0.000000e+00> : vector<2x4xf32>
    %18 = tpu.matmul %15, %16, %cst_14 {dimension_numbers = #tpu.dot_dimension_numbers<[1], [0], [0], [1], [0, 0, 1, 1], [], []>} : vector<2x8xf32>, vector<8x4xf32>, vector<2x4xf32> -> vector<2x4xf32>
    %19 = vector.broadcast %17 : vector<1x4xf32> to vector<2x4xf32>
    %20 = arith.addf %18, %19 : vector<2x4xf32>
    %cst_15 = arith.constant 0.000000e+00 : f32
    %21 = vector.broadcast %cst_15 : f32 to vector<2x4xf32>
    %22 = arith.maximumf %20, %21 : vector<2x4xf32>
    %c88 = arith.constant 88 : index
    %c0_16 = arith.constant 0 : index
    %23 = vector.load %arg2[%c88, %c0_16] : memref<352x128xf32, #tpu.memory_space<vmem>>, vector<4x4xf32>
    %c3 = arith.constant 3 : index
    %c0_17 = arith.constant 0 : index
    %24 = vector.load %arg3[%c3, %c0_17] : memref<8x128xf32, #tpu.memory_space<vmem>>, vector<1x4xf32>
    %cst_18 = arith.constant dense<0.000000e+00> : vector<2x4xf32>
    %25 = tpu.matmul %22, %23, %cst_18 {dimension_numbers = #tpu.dot_dimension_numbers<[1], [0], [0], [1], [0, 0, 1, 1], [], []>} : vector<2x4xf32>, vector<4x4xf32>, vector<2x4xf32> -> vector<2x4xf32>
    %26 = vector.broadcast %24 : vector<1x4xf32> to vector<2x4xf32>
    %27 = arith.addf %25, %26 : vector<2x4xf32>
    %c0_19 = arith.constant 0 : index
    %c0_20 = arith.constant 0 : index
    %28 = vector.load %arg1[%c0_19, %c0_20] : memref<2x6xf32, #tpu.memory_space<vmem>>, vector<2x6xf32>
    %29 = tpu.concatenate %27, %28 in 1 : vector<2x4xf32>, vector<2x6xf32> -> vector<2x10xf32>
    %c96 = arith.constant 96 : index
    %c0_21 = arith.constant 0 : index
    %30 = vector.load %arg2[%c96, %c0_21] : memref<352x128xf32, #tpu.memory_space<vmem>>, vector<10x128xf32>
    %c4 = arith.constant 4 : index
    %c0_22 = arith.constant 0 : index
    %31 = vector.load %arg3[%c4, %c0_22] : memref<8x128xf32, #tpu.memory_space<vmem>>, vector<1x128xf32>
    %cst_23 = arith.constant dense<0.000000e+00> : vector<2x128xf32>
    %32 = tpu.matmul %29, %30, %cst_23 {dimension_numbers = #tpu.dot_dimension_numbers<[1], [0], [0], [1], [0, 0, 1, 1], [], []>} : vector<2x10xf32>, vector<10x128xf32>, vector<2x128xf32> -> vector<2x128xf32>
    %33 = vector.broadcast %31 : vector<1x128xf32> to vector<2x128xf32>
    %34 = arith.addf %32, %33 : vector<2x128xf32>
    %cst_24 = arith.constant 0.000000e+00 : f32
    %35 = vector.broadcast %cst_24 : f32 to vector<2x128xf32>
    %36 = arith.maximumf %34, %35 : vector<2x128xf32>
    %c112 = arith.constant 112 : index
    %c0_25 = arith.constant 0 : index
    %37 = vector.load %arg2[%c112, %c0_25] : memref<352x128xf32, #tpu.memory_space<vmem>>, vector<128x64xf32>
    %c5 = arith.constant 5 : index
    %c0_26 = arith.constant 0 : index
    %38 = vector.load %arg3[%c5, %c0_26] : memref<8x128xf32, #tpu.memory_space<vmem>>, vector<1x64xf32>
    %cst_27 = arith.constant dense<0.000000e+00> : vector<2x64xf32>
    %39 = tpu.matmul %36, %37, %cst_27 {dimension_numbers = #tpu.dot_dimension_numbers<[1], [0], [0], [1], [0, 0, 1, 1], [], []>} : vector<2x128xf32>, vector<128x64xf32>, vector<2x64xf32> -> vector<2x64xf32>
    %40 = vector.broadcast %38 : vector<1x64xf32> to vector<2x64xf32>
    %41 = arith.addf %39, %40 : vector<2x64xf32>
    %cst_28 = arith.constant 0.000000e+00 : f32
    %42 = vector.broadcast %cst_28 : f32 to vector<2x64xf32>
    %43 = arith.maximumf %41, %42 : vector<2x64xf32>
    %c240 = arith.constant 240 : index
    %c0_29 = arith.constant 0 : index
    %44 = vector.load %arg2[%c240, %c0_29] : memref<352x128xf32, #tpu.memory_space<vmem>>, vector<64x48xf32>
    %c6 = arith.constant 6 : index
    %c0_30 = arith.constant 0 : index
    %45 = vector.load %arg3[%c6, %c0_30] : memref<8x128xf32, #tpu.memory_space<vmem>>, vector<1x48xf32>
    %cst_31 = arith.constant dense<0.000000e+00> : vector<2x48xf32>
    %46 = tpu.matmul %43, %44, %cst_31 {dimension_numbers = #tpu.dot_dimension_numbers<[1], [0], [0], [1], [0, 0, 1, 1], [], []>} : vector<2x64xf32>, vector<64x48xf32>, vector<2x48xf32> -> vector<2x48xf32>
    %47 = vector.broadcast %45 : vector<1x48xf32> to vector<2x48xf32>
    %48 = arith.addf %46, %47 : vector<2x48xf32>
    %c304 = arith.constant 304 : index
    %c0_32 = arith.constant 0 : index
    %49 = vector.load %arg2[%c304, %c0_32] : memref<352x128xf32, #tpu.memory_space<vmem>>, vector<48x24xf32>
    %c7 = arith.constant 7 : index
    %c0_33 = arith.constant 0 : index
    %50 = vector.load %arg3[%c7, %c0_33] : memref<8x128xf32, #tpu.memory_space<vmem>>, vector<1x24xf32>
    %cst_34 = arith.constant dense<0.000000e+00> : vector<2x24xf32>
    %51 = tpu.matmul %48, %49, %cst_34 {dimension_numbers = #tpu.dot_dimension_numbers<[1], [0], [0], [1], [0, 0, 1, 1], [], []>} : vector<2x48xf32>, vector<48x24xf32>, vector<2x24xf32> -> vector<2x24xf32>
    %52 = vector.broadcast %50 : vector<1x24xf32> to vector<2x24xf32>
    %53 = arith.addf %51, %52 : vector<2x24xf32>
    %cst_35 = arith.constant 0.000000e+00 : f32
    %54 = vector.broadcast %cst_35 : f32 to vector<2x24xf32>
    %55 = arith.maximumf %53, %54 : vector<2x24xf32>
    %56 = math.absf %53 : vector<2x24xf32>
    %cst_36 = arith.constant 0.000000e+00 : f32
    %57 = vector.broadcast %cst_36 : f32 to vector<2x24xf32>
    %58 = arith.subf %57, %56 : vector<2x24xf32>
    %59 = math.exp %58 : vector<2x24xf32>
    %cst_37 = arith.constant 1.000000e+00 : f32
    %60 = vector.broadcast %cst_37 : f32 to vector<2x24xf32>
    %61 = arith.addf %60, %59 : vector<2x24xf32>
    %62 = math.log %61 : vector<2x24xf32>
    %63 = arith.addf %55, %62 : vector<2x24xf32>
    %64 = tpu.iota {dimensions = array<i32: 1>} : vector<2x24xi32>
    %c6_i32 = arith.constant 6 : i32
    %65 = vector.broadcast %c6_i32 : i32 to vector<2x24xi32>
    %66 = arith.cmpi slt, %64, %65 : vector<2x24xi32>
    %67 = arith.select %66, %53, %63 : vector<2x24xi1>, vector<2x24xf32>
    %c12_i32 = arith.constant 12 : i32
    %68 = vector.broadcast %c12_i32 : i32 to vector<2x24xi32>
    %69 = arith.cmpi sge, %64, %68 : vector<2x24xi32>
    %c18_i32 = arith.constant 18 : i32
    %70 = vector.broadcast %c18_i32 : i32 to vector<2x24xi32>
    %71 = arith.cmpi slt, %64, %70 : vector<2x24xi32>
    %72 = arith.andi %69, %71 : vector<2x24xi1>
    %cst_38 = arith.constant 1.000000e+00 : f32
    %73 = vector.broadcast %cst_38 : f32 to vector<2x24xf32>
    %74 = arith.addf %67, %73 : vector<2x24xf32>
    %75 = arith.select %72, %74, %67 : vector<2x24xi1>, vector<2x24xf32>
    %c0_39 = arith.constant 0 : index
    %c0_40 = arith.constant 0 : index
    %76 = vector.load %arg4[%c0_39, %c0_40] : memref<2x24xf32, #tpu.memory_space<vmem>>, vector<2x24xf32>
    tpu.vector_store %arg4[%c0_39, %c0_40], %75 {strides = array<i32>} : memref<2x24xf32, #tpu.memory_space<vmem>>, vector<2x24xf32>,
    return
  }
}

</mosaic_0001>

<llo_original>
// kernel: tpu_custom_call.1
$region0: #{tpu_custom_call.1}
  #allocation0 [shape = 'u32[]', space=smem, size = 0x4, offset = 0x4, fixed_abs, tag = 'smem constant byte address 0x4 - core index']
  #allocation1 [shape = 'u32[144,128]{1,0:T(1,128)}', space=vmem, size = 0x12000, scoped, tag = 'internal scratch']
  %s0 = inlined_call_operand.hbm [shape: f32[2,16,64], index: 0, kind: input, shape index: {}]
  %s1 = inlined_call_operand.vmem [shape: f32[2,6], index: 1, kind: input, shape index: {}]
  %s2 = inlined_call_operand.hbm [shape: f32[352,128], index: 2, kind: input, shape index: {}]
  %s3 = inlined_call_operand.vmem [shape: f32[8,128], index: 3, kind: input, shape index: {}]
  %s4 = inlined_call_operand.hbm [shape: f32[2,24], index: 4, kind: output, shape index: {}]
  %s5 = sld [smem:[#allocation0]]
  $region34: #{tpu_custom_call.1} parent=0
    _
  %s7 = ssub.s32 1, %s5
  %s8 = scalar_select 0, %s7, %s5
  $region1: #{tpu_custom_call.1} parent=0
    #allocation2 [shape = 'u8[16384]{0}', space=vmem, size = 0x4000, scoped, tag = 'input window, operand 0, single buffered']
    #allocation3 [shape = 's32[1]{0}', space=sflag, size = 0x4, scoped, tag = 'scoped memory for tpu_custom_call.1']
    #allocation4 [shape = 's32[1]{0}', space=sflag, size = 0x4, scoped, tag = 'scoped memory for tpu_custom_call.1']
    #allocation5 [shape = 'u8[180224]{0}', space=vmem, size = 0x2c000, scoped, tag = 'input window, operand 2, single buffered']
    #allocation6 [shape = 's32[1]{0}', space=sflag, size = 0x4, scoped, tag = 'scoped memory for tpu_custom_call.1']
    #allocation7 [shape = 'u8[1024]{0}', space=vmem, size = 0x400, scoped, tag = 'output window, operand 0, single buffered']
    %9 = vsyncpa [#allocation3], 0
    %10 = vsyncpa [#allocation6], 0
    %11 = vsyncpa [#allocation4], 0
    // Predicated region
    $region2: #{tpu_custom_call.1} parent=1 // pred_check
      _
    $region3: #{tpu_custom_call.1} parent=1 // pred_check_branch
      %13 = sbr.rel (0) target = $region5
    $region4: #{tpu_custom_call.1} parent=1 // pred_region
      %s15 = ssub.s32 512, 512
      %16 = vsyncadd [#allocation3], %s15
      %s17 = sshll.u32 [#allocation2], 4
      %s18 = int_to_ptr.vmem [resolvable:$true] %s17
      %23 = dma.hbm_to_vmem [thread:$0]  %s0, 512, %s18, [#allocation3], 128, 128, 8
    $region5: #{tpu_custom_call.1} parent=1 // pred_fallthru
      _
    // Predicated region
    $region6: #{tpu_custom_call.1} parent=1 // pred_check
      _
    $region7: #{tpu_custom_call.1} parent=1 // pred_check_branch
      %25 = sbr.rel (0) target = $region9
    $region8: #{tpu_custom_call.1} parent=1 // pred_region
      _
    $region9: #{tpu_custom_call.1} parent=1 // pred_fallthru
      _
    // Predicated region
    $region10: #{tpu_custom_call.1} parent=1 // pred_check
      _
    $region11: #{tpu_custom_call.1} parent=1 // pred_check_branch
      %27 = sbr.rel (0) target = $region13
    $region12: #{tpu_custom_call.1} parent=1 // pred_region
      %s29 = ssub.s32 5632, 5632
      %30 = vsyncadd [#allocation6], %s29
      %s31 = sshll.u32 [#allocation5], 4
      %s32 = int_to_ptr.vmem [resolvable:$true] %s31
      %37 = dma.hbm_to_vmem [thread:$0]  %s2, 5632, %s32, [#allocation6], 128, 128, 8
    $region13: #{tpu_custom_call.1} parent=1 // pred_fallthru
      _
    // Predicated region
    $region14: #{tpu_custom_call.1} parent=1 // pred_check
      _
    $region15: #{tpu_custom_call.1} parent=1 // pred_check_branch
      %39 = sbr.rel (0) target = $region17
    $region16: #{tpu_custom_call.1} parent=1 // pred_region
      _
    $region17: #{tpu_custom_call.1} parent=1 // pred_fallthru
      _
    // Predicated region
    $region18: #{tpu_custom_call.1} parent=1 // pred_check
      _
    $region19: #{tpu_custom_call.1} parent=1 // pred_check_branch
      %41 = sbr.rel (0) target = $region21
    $region20: #{tpu_custom_call.1} parent=1 // pred_region
      %42 = dma.done [#allocation3], 512
    $region21: #{tpu_custom_call.1} parent=1 // pred_fallthru
      _
    // Predicated region
    $region22: #{tpu_custom_call.1} parent=1 // pred_check
      _
    $region23: #{tpu_custom_call.1} parent=1 // pred_check_branch
      %44 = sbr.rel (0) target = $region25
    $region24: #{tpu_custom_call.1} parent=1 // pred_region
      %45 = dma.done [#allocation6], 5632
    $region25: #{tpu_custom_call.1} parent=1 // pred_fallthru
      _
    %v46 = vld [vmem:[#allocation2] sm:$0xff]
    %v47 = vld [vmem:[#allocation2 + $0x8] sm:$0xff]
    %v48 = vld [vmem:[#allocation2 + $0x10] sm:$0xff]
    %v49 = vld [vmem:[#allocation2 + $0x18] sm:$0xff]
    %vm50 = vcmask 523264
    %v51 = vsel %vm50, %v46, -inf
    %v52 = vsel %vm50, %v47, -inf
    %v53 = vmax.f32 %v51, %v52
    %v54 = vrot.slane %v53, 4
    %v55 = vmax.f32 %v53, %v54
    %v56 = vrot.slane %v55, 2
    %v57 = vmax.f32 %v55, %v56
    %v58 = vrot.slane %v57, 1
    %v59 = vmax.f32 %v57, %v58
    %v60 = vsel %vm50, %v48, -inf
    %v61 = vsel %vm50, %v49, -inf
    %v62 = vmax.f32 %v60, %v61
    %v63 = vrot.slane %v62, 4
    %v64 = vmax.f32 %v62, %v63
    %v65 = vrot.slane %v64, 2
    %v66 = vmax.f32 %v64, %v65
    %v67 = vrot.slane %v66, 1
    %v68 = vmax.f32 %v66, %v67
    %v69 = vld [vmem:[#allocation5] sm:$0xff]
    %v70 = vld [vmem:[#allocation5 + $0x8] sm:$0xff]
    %v71 = vld [vmem:[#allocation5 + $0x10] sm:$0xff]
    %v72 = vld [vmem:[#allocation5 + $0x18] sm:$0xff]
    %v73 = vld [vmem:[#allocation5 + $0x20] sm:$0xff]
    %v74 = vld [vmem:[#allocation5 + $0x28] sm:$0xff]
    %v75 = vld [vmem:[#allocation5 + $0x30] sm:$0xff]
    %v76 = vld [vmem:[#allocation5 + $0x38] sm:$0xff]
    %v77 = vld [vmem:[%s3] sm:$0x1]
    %v78 = vlaneseq
    %v79 = vshrl.u32 %v78, 7
    %v80 = vsub.s32 0, %v79
    %v81 = vrot.slane %v77, %v80
    %vm84 = vcmask 1041409
    %v85 = vsel %vm84, %v68, %v59
    %v86 = vsel %vm50, %v85, 0
    %88 = vmatprep.subr.mxu0 0.0
    %89 = vmatpush1.msra.mxu0 %v69
    %90 = vmatprep.subr.mxu0 0.0
    %91 = vmatpush1.msra.mxu0 %v70
    %92 = vmatprep.subr.mxu0 0.0
    %93 = vmatpush1.msra.mxu0 %v71
    %94 = vmatprep.subr.mxu0 0.0
    %95 = vmatpush1.msra.mxu0 %v72
    %96 = vmatprep.subr.mxu0 0.0
    %97 = vmatpush1.msra.mxu0 %v73
    %98 = vmatprep.subr.mxu0 0.0
    %99 = vmatpush1.msra.mxu0 %v74
    %100 = vmatprep.subr.mxu0 0.0
    %101 = vmatpush1.msra.mxu0 %v75
    %102 = vmatprep.subr.mxu0 0.0
    %103 = vmatpush1.msra.mxu0 %v76
    %104 = vmatprep.subr.mxu0 0.0
    %105 = vmatpush1.msra.mxu0 0.0
    %106 = vmatprep.subr.mxu0 0.0
    %107 = vmatpush1.msra.mxu0 0.0
    %108 = vmatprep.subr.mxu0 0.0
    %109 = vmatpush1.msra.mxu0 0.0
    %110 = vmatprep.subr.mxu0 0.0
    %111 = vmatpush1.msra.mxu0 0.0
    %112 = vmatprep.subr.mxu0 0.0
    %113 = vmatpush1.msra.mxu0 0.0
    %114 = vmatprep.subr.mxu0 0.0
    %115 = vmatpush1.msra.mxu0 0.0
    %116 = vmatprep.subr.mxu0 0.0
    %117 = vmatpush1.msra.mxu0 0.0
    %118 = vmatprep.subr.mxu0 0.0
    %119 = vmatpush1.msra.mxu0 0.0
    %120 = vmatprep.subr.mxu0 0.0
    %121 = vmatpush1.msra.mxu0 0.0
    %122 = vmatprep.subr.mxu0 0.0
    %123 = vmatpush1.msra.mxu0 0.0
    %124 = vmatprep.subr.mxu0 0.0
    %125 = vmatpush1.msra.mxu0 0.0
    %126 = vmatprep.subr.mxu0 0.0
    %127 = vmatpush1.msra.mxu0 0.0
    %128 = vmatprep.subr.mxu0 0.0
    %129 = vmatpush1.msra.mxu0 0.0
    %130 = vmatprep.subr.mxu0 0.0
    %131 = vmatpush1.msra.mxu0 0.0
    %132 = vmatprep.subr.mxu0 0.0
    %133 = vmatpush1.msra.mxu0 0.0
    %134 = vmatprep.subr.mxu0 0.0
    %135 = vmatpush1.msra.mxu0 0.0
    %136 = vmatprep.subr.mxu0 0.0
    %137 = vmatpush1.msra.mxu0 0.0
    %138 = vmatprep.subr.mxu0 0.0
    %139 = vmatpush1.msra.mxu0 0.0
    %140 = vmatprep.subr.mxu0 0.0
    %141 = vmatpush1.msra.mxu0 0.0
    %142 = vmatprep.subr.mxu0 0.0
    %143 = vmatpush1.msra.mxu0 0.0
    %144 = vmatprep.subr.mxu0 0.0
    %145 = vmatpush1.msra.mxu0 0.0
    %146 = vmatprep.subr.mxu0 0.0
    %147 = vmatpush1.msra.mxu0 0.0
    %148 = vmatprep.subr.mxu0 0.0
    %149 = vmatpush1.msra.mxu0 0.0
    %150 = vmatprep.subr.mxu0 0.0
    %151 = vmatpush1.msra.mxu0 0.0
    %152 = vmatprep.mubr.f32.mxu0 0.0
    %153 = vmatmul.mubr.f32.gmra.mrb[0].mxu0 %v86
    %v154 = vpop.f32.mrb[0].mxu0
    %v155 = vadd.f32 %v81, %v154
    %v156 = vpop.f32.mrb[0].mxu0
    %157 = vdwg.mxu0
    %v158 = vmax.f32 %v155, 0.0
    %v159 = vld [vmem:[#allocation5 + $0x40] sm:$0xff]
    %v160 = vld [vmem:[#allocation5 + $0x48] sm:$0xff]
    %v161 = vld [vmem:[%s3 + $0x1] sm:$0x1]
    %v162 = vlaneseq
    %v163 = vshrl.u32 %v162, 7
    %v164 = vsub.s32 0, %v163
    %v165 = vrot.slane %v161, %v164
    %vm166 = vcmask 130048
    %v168 = vsel %vm166, %v158, 0
    %170 = vmatprep.subr.mxu0 0.0
    %171 = vmatpush1.msra.mxu0 %v159
    %172 = vmatprep.subr.mxu0 0.0
    %173 = vmatpush1.msra.mxu0 %v160
    %174 = vmatprep.subr.mxu0 0.0
    %175 = vmatpush1.msra.mxu0 0.0
    %176 = vmatprep.subr.mxu0 0.0
    %177 = vmatpush1.msra.mxu0 0.0
    %178 = vmatprep.subr.mxu0 0.0
    %179 = vmatpush1.msra.mxu0 0.0
    %180 = vmatprep.subr.mxu0 0.0
    %181 = vmatpush1.msra.mxu0 0.0
    %182 = vmatprep.subr.mxu0 0.0
    %183 = vmatpush1.msra.mxu0 0.0
    %184 = vmatprep.subr.mxu0 0.0
    %185 = vmatpush1.msra.mxu0 0.0
    %186 = vmatprep.subr.mxu0 0.0
    %187 = vmatpush1.msra.mxu0 0.0
    %188 = vmatprep.subr.mxu0 0.0
    %189 = vmatpush1.msra.mxu0 0.0
    %190 = vmatprep.subr.mxu0 0.0
    %191 = vmatpush1.msra.mxu0 0.0
    %192 = vmatprep.subr.mxu0 0.0
    %193 = vmatpush1.msra.mxu0 0.0
    %194 = vmatprep.subr.mxu0 0.0
    %195 = vmatpush1.msra.mxu0 0.0
    %196 = vmatprep.subr.mxu0 0.0
    %197 = vmatpush1.msra.mxu0 0.0
    %198 = vmatprep.subr.mxu0 0.0
    %199 = vmatpush1.msra.mxu0 0.0
    %200 = vmatprep.subr.mxu0 0.0
    %201 = vmatpush1.msra.mxu0 0.0
    %202 = vmatprep.subr.mxu0 0.0
    %203 = vmatpush1.msra.mxu0 0.0
    %204 = vmatprep.subr.mxu0 0.0
    %205 = vmatpush1.msra.mxu0 0.0
    %206 = vmatprep.subr.mxu0 0.0
    %207 = vmatpush1.msra.mxu0 0.0
    %208 = vmatprep.subr.mxu0 0.0
    %209 = vmatpush1.msra.mxu0 0.0
    %210 = vmatprep.subr.mxu0 0.0
    %211 = vmatpush1.msra.mxu0 0.0
    %212 = vmatprep.subr.mxu0 0.0
    %213 = vmatpush1.msra.mxu0 0.0
    %214 = vmatprep.subr.mxu0 0.0
    %215 = vmatpush1.msra.mxu0 0.0
    %216 = vmatprep.subr.mxu0 0.0
    %217 = vmatpush1.msra.mxu0 0.0
    %218 = vmatprep.subr.mxu0 0.0
    %219 = vmatpush1.msra.mxu0 0.0
    %220 = vmatprep.subr.mxu0 0.0
    %221 = vmatpush1.msra.mxu0 0.0
    %222 = vmatprep.subr.mxu0 0.0
    %223 = vmatpush1.msra.mxu0 0.0
    %224 = vmatprep.subr.mxu0 0.0
    %225 = vmatpush1.msra.mxu0 0.0
    %226 = vmatprep.subr.mxu0 0.0
    %227 = vmatpush1.msra.mxu0 0.0
    %228 = vmatprep.subr.mxu0 0.0
    %229 = vmatpush1.msra.mxu0 0.0
    %230 = vmatprep.subr.mxu0 0.0
    %231 = vmatpush1.msra.mxu0 0.0
    %232 = vmatprep.subr.mxu0 0.0
    %233 = vmatpush1.msra.mxu0 0.0
    %234 = vmatprep.mubr.f32.mxu0 0.0
    %235 = vmatmul.mubr.f32.gmra.mrb[0].mxu0 %v168
    %v236 = vpop.f32.mrb[0].mxu0
    %v237 = vadd.f32 %v165, %v236
    %v238 = vpop.f32.mrb[0].mxu0
    %239 = vdwg.mxu0
    %v240 = vmax.f32 %v237, 0.0
    %v241 = vld [vmem:[#allocation5 + $0x50] sm:$0xff]
    %v242 = vld [vmem:[%s3 + $0x2] sm:$0x1]
    %v243 = vlaneseq
    %v244 = vshrl.u32 %v243, 7
    %v245 = vsub.s32 0, %v244
    %v246 = vrot.slane %v242, %v245
    %vm247 = vcmask 64512
    %v249 = vsel %vm247, %v240, 0
    %251 = vmatprep.subr.mxu0 0.0
    %252 = vmatpush1.msra.mxu0 %v241
    %253 = vmatprep.subr.mxu0 0.0
    %254 = vmatpush1.msra.mxu0 0.0
    %255 = vmatprep.subr.mxu0 0.0
    %256 = vmatpush1.msra.mxu0 0.0
    %257 = vmatprep.subr.mxu0 0.0
    %258 = vmatpush1.msra.mxu0 0.0
    %259 = vmatprep.subr.mxu0 0.0
    %260 = vmatpush1.msra.mxu0 0.0
    %261 = vmatprep.subr.mxu0 0.0
    %262 = vmatpush1.msra.mxu0 0.0
    %263 = vmatprep.subr.mxu0 0.0
    %264 = vmatpush1.msra.mxu0 0.0
    %265 = vmatprep.subr.mxu0 0.0
    %266 = vmatpush1.msra.mxu0 0.0
    %267 = vmatprep.subr.mxu0 0.0
    %268 = vmatpush1.msra.mxu0 0.0
    %269 = vmatprep.subr.mxu0 0.0
    %270 = vmatpush1.msra.mxu0 0.0
    %271 = vmatprep.subr.mxu0 0.0
    %272 = vmatpush1.msra.mxu0 0.0
    %273 = vmatprep.subr.mxu0 0.0
    %274 = vmatpush1.msra.mxu0 0.0
    %275 = vmatprep.subr.mxu0 0.0
    %276 = vmatpush1.msra.mxu0 0.0
    %277 = vmatprep.subr.mxu0 0.0
    %278 = vmatpush1.msra.mxu0 0.0
    %279 = vmatprep.subr.mxu0 0.0
    %280 = vmatpush1.msra.mxu0 0.0
    %281 = vmatprep.subr.mxu0 0.0
    %282 = vmatpush1.msra.mxu0 0.0
    %283 = vmatprep.subr.mxu0 0.0
    %284 = vmatpush1.msra.mxu0 0.0
    %285 = vmatprep.subr.mxu0 0.0
    %286 = vmatpush1.msra.mxu0 0.0
    %287 = vmatprep.subr.mxu0 0.0
    %288 = vmatpush1.msra.mxu0 0.0
    %289 = vmatprep.subr.mxu0 0.0
    %290 = vmatpush1.msra.mxu0 0.0
    %291 = vmatprep.subr.mxu0 0.0
    %292 = vmatpush1.msra.mxu0 0.0
    %293 = vmatprep.subr.mxu0 0.0
    %294 = vmatpush1.msra.mxu0 0.0
    %295 = vmatprep.subr.mxu0 0.0
    %296 = vmatpush1.msra.mxu0 0.0
    %297 = vmatprep.subr.mxu0 0.0
    %298 = vmatpush1.msra.mxu0 0.0
    %299 = vmatprep.subr.mxu0 0.0
    %300 = vmatpush1.msra.mxu0 0.0
    %301 = vmatprep.subr.mxu0 0.0
    %302 = vmatpush1.msra.mxu0 0.0
    %303 = vmatprep.subr.mxu0 0.0
    %304 = vmatpush1.msra.mxu0 0.0
    %305 = vmatprep.subr.mxu0 0.0
    %306 = vmatpush1.msra.mxu0 0.0
    %307 = vmatprep.subr.mxu0 0.0
    %308 = vmatpush1.msra.mxu0 0.0
    %309 = vmatprep.subr.mxu0 0.0
    %310 = vmatpush1.msra.mxu0 0.0
    %311 = vmatprep.subr.mxu0 0.0
    %312 = vmatpush1.msra.mxu0 0.0
    %313 = vmatprep.subr.mxu0 0.0
    %314 = vmatpush1.msra.mxu0 0.0
    %315 = vmatprep.mubr.f32.mxu0 0.0
    %316 = vmatmul.mubr.f32.gmra.mrb[0].mxu0 %v249
    %v317 = vpop.f32.mrb[0].mxu0
    %v318 = vadd.f32 %v246, %v317
    %v319 = vpop.f32.mrb[0].mxu0
    %320 = vdwg.mxu0
    %v321 = vmax.f32 %v318, 0.0
    %v322 = vld [vmem:[#allocation5 + $0x58] sm:$0xf]
    %v323 = vld [vmem:[%s3 + $0x3] sm:$0x1]
    %v324 = vlaneseq
    %v325 = vshrl.u32 %v324, 7
    %v326 = vsub.s32 0, %v325
    %v327 = vrot.slane %v323, %v326
    %vm328 = vcmask 31744
    %v330 = vsel %vm328, %v321, 0
    %vm332 = vcmask 1043456
    %v334 = vsel %vm332, %v322, 0
    %336 = vmatprep.subr.mxu0 0.0
    %337 = vmatpush1.msra.mxu0 %v334
    %338 = vmatprep.subr.mxu0 0.0
    %339 = vmatpush1.msra.mxu0 0.0
    %340 = vmatprep.subr.mxu0 0.0
    %341 = vmatpush1.msra.mxu0 0.0
    %342 = vmatprep.subr.mxu0 0.0
    %343 = vmatpush1.msra.mxu0 0.0
    %344 = vmatprep.subr.mxu0 0.0
    %345 = vmatpush1.msra.mxu0 0.0
    %346 = vmatprep.subr.mxu0 0.0
    %347 = vmatpush1.msra.mxu0 0.0
    %348 = vmatprep.subr.mxu0 0.0
    %349 = vmatpush1.msra.mxu0 0.0
    %350 = vmatprep.subr.mxu0 0.0
    %351 = vmatpush1.msra.mxu0 0.0
    %352 = vmatprep.subr.mxu0 0.0
    %353 = vmatpush1.msra.mxu0 0.0
    %354 = vmatprep.subr.mxu0 0.0
    %355 = vmatpush1.msra.mxu0 0.0
    %356 = vmatprep.subr.mxu0 0.0
    %357 = vmatpush1.msra.mxu0 0.0
    %358 = vmatprep.subr.mxu0 0.0
    %359 = vmatpush1.msra.mxu0 0.0
    %360 = vmatprep.subr.mxu0 0.0
    %361 = vmatpush1.msra.mxu0 0.0
    %362 = vmatprep.subr.mxu0 0.0
    %363 = vmatpush1.msra.mxu0 0.0
    %364 = vmatprep.subr.mxu0 0.0
    %365 = vmatpush1.msra.mxu0 0.0
    %366 = vmatprep.subr.mxu0 0.0
    %367 = vmatpush1.msra.mxu0 0.0
    %368 = vmatprep.subr.mxu0 0.0
    %369 = vmatpush1.msra.mxu0 0.0
    %370 = vmatprep.subr.mxu0 0.0
    %371 = vmatpush1.msra.mxu0 0.0
    %372 = vmatprep.subr.mxu0 0.0
    %373 = vmatpush1.msra.mxu0 0.0
    %374 = vmatprep.subr.mxu0 0.0
    %375 = vmatpush1.msra.mxu0 0.0
    %376 = vmatprep.subr.mxu0 0.0
    %377 = vmatpush1.msra.mxu0 0.0
    %378 = vmatprep.subr.mxu0 0.0
    %379 = vmatpush1.msra.mxu0 0.0
    %380 = vmatprep.subr.mxu0 0.0
    %381 = vmatpush1.msra.mxu0 0.0
    %382 = vmatprep.subr.mxu0 0.0
    %383 = vmatpush1.msra.mxu0 0.0
    %384 = vmatprep.subr.mxu0 0.0
    %385 = vmatpush1.msra.mxu0 0.0
    %386 = vmatprep.subr.mxu0 0.0
    %387 = vmatpush1.msra.mxu0 0.0
    %388 = vmatprep.subr.mxu0 0.0
    %389 = vmatpush1.msra.mxu0 0.0
    %390 = vmatprep.subr.mxu0 0.0
    %391 = vmatpush1.msra.mxu0 0.0
    %392 = vmatprep.subr.mxu0 0.0
    %393 = vmatpush1.msra.mxu0 0.0
    %394 = vmatprep.subr.mxu0 0.0
    %395 = vmatpush1.msra.mxu0 0.0
    %396 = vmatprep.subr.mxu0 0.0
    %397 = vmatpush1.msra.mxu0 0.0
    %398 = vmatprep.subr.mxu0 0.0
    %399 = vmatpush1.msra.mxu0 0.0
    %400 = vmatprep.mubr.f32.mxu0 0.0
    %401 = vmatmul.mubr.f32.gmra.mrb[0].mxu0 %v330
    %v402 = vpop.f32.mrb[0].mxu0
    %v403 = vadd.f32 %v327, %v402
    %v404 = vpop.f32.mrb[0].mxu0
    %405 = vdwg.mxu0
    %v406 = vld [vmem:[%s1] sm:$0x3]
    %408 = vrot.lane.b32.xlu0 %v406, 4
    %v409 = vpop.permute.xlu0 %408
    %v411 = vsel %vm328, %v403, %v409
    %v412 = vld [vmem:[#allocation5 + $0x60] sm:$0xff]
    %v413 = vld [vmem:[#allocation5 + $0x68] sm:$0x3]
    %v414 = vld [vmem:[%s3 + $0x4] sm:$0x1]
    %v415 = vlaneseq
    %v416 = vshrl.u32 %v415, 7
    %v417 = vsub.s32 0, %v416
    %v418 = vrot.slane %v414, %v417
    %vm419 = vcmask 80896
    %v421 = vsel %vm419, %v411, 0
    %vm423 = vcmask 1041408
    %v425 = vsel %vm423, %v413, 0
    %427 = vmatprep.subr.mxu0 0.0
    %428 = vmatpush1.msra.mxu0 %v412
    %429 = vmatprep.subr.mxu0 0.0
    %430 = vmatpush1.msra.mxu0 %v425
    %431 = vmatprep.subr.mxu0 0.0
    %432 = vmatpush1.msra.mxu0 0.0
    %433 = vmatprep.subr.mxu0 0.0
    %434 = vmatpush1.msra.mxu0 0.0
    %435 = vmatprep.subr.mxu0 0.0
    %436 = vmatpush1.msra.mxu0 0.0
    %437 = vmatprep.subr.mxu0 0.0
    %438 = vmatpush1.msra.mxu0 0.0
    %439 = vmatprep.subr.mxu0 0.0
    %440 = vmatpush1.msra.mxu0 0.0
    %441 = vmatprep.subr.mxu0 0.0
    %442 = vmatpush1.msra.mxu0 0.0
    %443 = vmatprep.subr.mxu0 0.0
    %444 = vmatpush1.msra.mxu0 0.0
    %445 = vmatprep.subr.mxu0 0.0
    %446 = vmatpush1.msra.mxu0 0.0
    %447 = vmatprep.subr.mxu0 0.0
    %448 = vmatpush1.msra.mxu0 0.0
    %449 = vmatprep.subr.mxu0 0.0
    %450 = vmatpush1.msra.mxu0 0.0
    %451 = vmatprep.subr.mxu0 0.0
    %452 = vmatpush1.msra.mxu0 0.0
    %453 = vmatprep.subr.mxu0 0.0
    %454 = vmatpush1.msra.mxu0 0.0
    %455 = vmatprep.subr.mxu0 0.0
    %456 = vmatpush1.msra.mxu0 0.0
    %457 = vmatprep.subr.mxu0 0.0
    %458 = vmatpush1.msra.mxu0 0.0
    %459 = vmatprep.subr.mxu0 0.0
    %460 = vmatpush1.msra.mxu0 0.0
    %461 = vmatprep.subr.mxu0 0.0
    %462 = vmatpush1.msra.mxu0 0.0
    %463 = vmatprep.subr.mxu0 0.0
    %464 = vmatpush1.msra.mxu0 0.0
    %465 = vmatprep.subr.mxu0 0.0
    %466 = vmatpush1.msra.mxu0 0.0
    %467 = vmatprep.subr.mxu0 0.0
    %468 = vmatpush1.msra.mxu0 0.0
    %469 = vmatprep.subr.mxu0 0.0
    %470 = vmatpush1.msra.mxu0 0.0
    %471 = vmatprep.subr.mxu0 0.0
    %472 = vmatpush1.msra.mxu0 0.0
    %473 = vmatprep.subr.mxu0 0.0
    %474 = vmatpush1.msra.mxu0 0.0
    %475 = vmatprep.subr.mxu0 0.0
    %476 = vmatpush1.msra.mxu0 0.0
    %477 = vmatprep.subr.mxu0 0.0
    %478 = vmatpush1.msra.mxu0 0.0
    %479 = vmatprep.subr.mxu0 0.0
    %480 = vmatpush1.msra.mxu0 0.0
    %481 = vmatprep.subr.mxu0 0.0
    %482 = vmatpush1.msra.mxu0 0.0
    %483 = vmatprep.subr.mxu0 0.0
    %484 = vmatpush1.msra.mxu0 0.0
    %485 = vmatprep.subr.mxu0 0.0
    %486 = vmatpush1.msra.mxu0 0.0
    %487 = vmatprep.subr.mxu0 0.0
    %488 = vmatpush1.msra.mxu0 0.0
    %489 = vmatprep.subr.mxu0 0.0
    %490 = vmatpush1.msra.mxu0 0.0
    %491 = vmatprep.mubr.f32.mxu0 0.0
    %492 = vmatmul.mubr.f32.gmra.mrb[0].mxu0 %v421
    %v493 = vpop.f32.mrb[0].mxu0
    %v494 = vadd.f32 %v418, %v493
    %v495 = vpop.f32.mrb[0].mxu0
    %496 = vdwg.mxu0
    %v497 = vmax.f32 %v494, 0.0
    %v498 = vld [vmem:[#allocation5 + $0x70] sm:$0xff]
    %v499 = vld [vmem:[#allocation5 + $0x78] sm:$0xff]
    %v500 = vld [vmem:[#allocation5 + $0x80] sm:$0xff]
    %v501 = vld [vmem:[#allocation5 + $0x88] sm:$0xff]
    %v502 = vld [vmem:[#allocation5 + $0x90] sm:$0xff]
    %v503 = vld [vmem:[#allocation5 + $0x98] sm:$0xff]
    %v504 = vld [vmem:[#allocation5 + $0xa0] sm:$0xff]
    %v505 = vld [vmem:[#allocation5 + $0xa8] sm:$0xff]
    %v506 = vld [vmem:[#allocation5 + $0xb0] sm:$0xff]
    %v507 = vld [vmem:[#allocation5 + $0xb8] sm:$0xff]
    %v508 = vld [vmem:[#allocation5 + $0xc0] sm:$0xff]
    %v509 = vld [vmem:[#allocation5 + $0xc8] sm:$0xff]
    %v510 = vld [vmem:[#allocation5 + $0xd0] sm:$0xff]
    %v511 = vld [vmem:[#allocation5 + $0xd8] sm:$0xff]
    %v512 = vld [vmem:[#allocation5 + $0xe0] sm:$0xff]
    %v513 = vld [vmem:[#allocation5 + $0xe8] sm:$0xff]
    %v514 = vld [vmem:[%s3 + $0x5] sm:$0x1]
    %v515 = vlaneseq
    %v516 = vshrl.u32 %v515, 7
    %v517 = vsub.s32 0, %v516
    %v518 = vrot.slane %v514, %v517
    %519 = vmatprep.subr.mxu0 0.0
    %520 = vmatpush1.msra.mxu0 %v498
    %521 = vmatprep.subr.mxu0 0.0
    %522 = vmatpush1.msra.mxu0 %v499
    %523 = vmatprep.subr.mxu0 0.0
    %524 = vmatpush1.msra.mxu0 %v500
    %525 = vmatprep.subr.mxu0 0.0
    %526 = vmatpush1.msra.mxu0 %v501
    %527 = vmatprep.subr.mxu0 0.0
    %528 = vmatpush1.msra.mxu0 %v502
    %529 = vmatprep.subr.mxu0 0.0
    %530 = vmatpush1.msra.mxu0 %v503
    %531 = vmatprep.subr.mxu0 0.0
    %532 = vmatpush1.msra.mxu0 %v504
    %533 = vmatprep.subr.mxu0 0.0
    %534 = vmatpush1.msra.mxu0 %v505
    %535 = vmatprep.subr.mxu0 0.0
    %536 = vmatpush1.msra.mxu0 %v506
    %537 = vmatprep.subr.mxu0 0.0
    %538 = vmatpush1.msra.mxu0 %v507
    %539 = vmatprep.subr.mxu0 0.0
    %540 = vmatpush1.msra.mxu0 %v508
    %541 = vmatprep.subr.mxu0 0.0
    %542 = vmatpush1.msra.mxu0 %v509
    %543 = vmatprep.subr.mxu0 0.0
    %544 = vmatpush1.msra.mxu0 %v510
    %545 = vmatprep.subr.mxu0 0.0
    %546 = vmatpush1.msra.mxu0 %v511
    %547 = vmatprep.subr.mxu0 0.0
    %548 = vmatpush1.msra.mxu0 %v512
    %549 = vmatprep.subr.mxu0 0.0
    %550 = vmatpush1.msra.mxu0 %v513
    %551 = vmatprep.subr.mxu0 0.0
    %552 = vmatpush1.msra.mxu0 0.0
    %553 = vmatprep.subr.mxu0 0.0
    %554 = vmatpush1.msra.mxu0 0.0
    %555 = vmatprep.subr.mxu0 0.0
    %556 = vmatpush1.msra.mxu0 0.0
    %557 = vmatprep.subr.mxu0 0.0
    %558 = vmatpush1.msra.mxu0 0.0
    %559 = vmatprep.subr.mxu0 0.0
    %560 = vmatpush1.msra.mxu0 0.0
    %561 = vmatprep.subr.mxu0 0.0
    %562 = vmatpush1.msra.mxu0 0.0
    %563 = vmatprep.subr.mxu0 0.0
    %564 = vmatpush1.msra.mxu0 0.0
    %565 = vmatprep.subr.mxu0 0.0
    %566 = vmatpush1.msra.mxu0 0.0
    %567 = vmatprep.subr.mxu0 0.0
    %568 = vmatpush1.msra.mxu0 0.0
    %569 = vmatprep.subr.mxu0 0.0
    %570 = vmatpush1.msra.mxu0 0.0
    %571 = vmatprep.subr.mxu0 0.0
    %572 = vmatpush1.msra.mxu0 0.0
    %573 = vmatprep.subr.mxu0 0.0
    %574 = vmatpush1.msra.mxu0 0.0
    %575 = vmatprep.subr.mxu0 0.0
    %576 = vmatpush1.msra.mxu0 0.0
    %577 = vmatprep.subr.mxu0 0.0
    %578 = vmatpush1.msra.mxu0 0.0
    %579 = vmatprep.subr.mxu0 0.0
    %580 = vmatpush1.msra.mxu0 0.0
    %581 = vmatprep.subr.mxu0 0.0
    %582 = vmatpush1.msra.mxu0 0.0
    %583 = vmatprep.mubr.f32.mxu0 0.0
    %584 = vmatmul.mubr.f32.gmra.mrb[0].mxu0 %v497
    %v585 = vpop.f32.mrb[0].mxu0
    %v586 = vadd.f32 %v518, %v585
    %v587 = vpop.f32.mrb[0].mxu0
    %588 = vdwg.mxu0
    %v589 = vmax.f32 %v586, 0.0
    %v590 = vld [vmem:[#allocation5 + $0xf0] sm:$0xff]
    %v591 = vld [vmem:[#allocation5 + $0xf8] sm:$0xff]
    %v592 = vld [vmem:[#allocation5 + $0x100] sm:$0xff]
    %v593 = vld [vmem:[#allocation5 + $0x108] sm:$0xff]
    %v594 = vld [vmem:[#allocation5 + $0x110] sm:$0xff]
    %v595 = vld [vmem:[#allocation5 + $0x118] sm:$0xff]
    %v596 = vld [vmem:[#allocation5 + $0x120] sm:$0xff]
    %v597 = vld [vmem:[#allocation5 + $0x128] sm:$0xff]
    %v598 = vld [vmem:[%s3 + $0x6] sm:$0x1]
    %v599 = vlaneseq
    %v600 = vshrl.u32 %v599, 7
    %v601 = vsub.s32 0, %v600
    %v602 = vrot.slane %v598, %v601
    %v604 = vsel %vm50, %v589, 0
    %606 = vmatprep.subr.mxu0 0.0
    %607 = vmatpush1.msra.mxu0 %v590
    %608 = vmatprep.subr.mxu0 0.0
    %609 = vmatpush1.msra.mxu0 %v591
    %610 = vmatprep.subr.mxu0 0.0
    %611 = vmatpush1.msra.mxu0 %v592
    %612 = vmatprep.subr.mxu0 0.0
    %613 = vmatpush1.msra.mxu0 %v593
    %614 = vmatprep.subr.mxu0 0.0
    %615 = vmatpush1.msra.mxu0 %v594
    %616 = vmatprep.subr.mxu0 0.0
    %617 = vmatpush1.msra.mxu0 %v595
    %618 = vmatprep.subr.mxu0 0.0
    %619 = vmatpush1.msra.mxu0 %v596
    %620 = vmatprep.subr.mxu0 0.0
    %621 = vmatpush1.msra.mxu0 %v597
    %622 = vmatprep.subr.mxu0 0.0
    %623 = vmatpush1.msra.mxu0 0.0
    %624 = vmatprep.subr.mxu0 0.0
    %625 = vmatpush1.msra.mxu0 0.0
    %626 = vmatprep.subr.mxu0 0.0
    %627 = vmatpush1.msra.mxu0 0.0
    %628 = vmatprep.subr.mxu0 0.0
    %629 = vmatpush1.msra.mxu0 0.0
    %630 = vmatprep.subr.mxu0 0.0
    %631 = vmatpush1.msra.mxu0 0.0
    %632 = vmatprep.subr.mxu0 0.0
    %633 = vmatpush1.msra.mxu0 0.0
    %634 = vmatprep.subr.mxu0 0.0
    %635 = vmatpush1.msra.mxu0 0.0
    %636 = vmatprep.subr.mxu0 0.0
    %637 = vmatpush1.msra.mxu0 0.0
    %638 = vmatprep.subr.mxu0 0.0
    %639 = vmatpush1.msra.mxu0 0.0
    %640 = vmatprep.subr.mxu0 0.0
    %641 = vmatpush1.msra.mxu0 0.0
    %642 = vmatprep.subr.mxu0 0.0
    %643 = vmatpush1.msra.mxu0 0.0
    %644 = vmatprep.subr.mxu0 0.0
    %645 = vmatpush1.msra.mxu0 0.0
    %646 = vmatprep.subr.mxu0 0.0
    %647 = vmatpush1.msra.mxu0 0.0
    %648 = vmatprep.subr.mxu0 0.0
    %649 = vmatpush1.msra.mxu0 0.0
    %650 = vmatprep.subr.mxu0 0.0
    %651 = vmatpush1.msra.mxu0 0.0
    %652 = vmatprep.subr.mxu0 0.0
    %653 = vmatpush1.msra.mxu0 0.0
    %654 = vmatprep.subr.mxu0 0.0
    %655 = vmatpush1.msra.mxu0 0.0
    %656 = vmatprep.subr.mxu0 0.0
    %657 = vmatpush1.msra.mxu0 0.0
    %658 = vmatprep.subr.mxu0 0.0
    %659 = vmatpush1.msra.mxu0 0.0
    %660 = vmatprep.subr.mxu0 0.0
    %661 = vmatpush1.msra.mxu0 0.0
    %662 = vmatprep.subr.mxu0 0.0
    %663 = vmatpush1.msra.mxu0 0.0
    %664 = vmatprep.subr.mxu0 0.0
    %665 = vmatpush1.msra.mxu0 0.0
    %666 = vmatprep.subr.mxu0 0.0
    %667 = vmatpush1.msra.mxu0 0.0
    %668 = vmatprep.subr.mxu0 0.0
    %669 = vmatpush1.msra.mxu0 0.0
    %670 = vmatprep.mubr.f32.mxu0 0.0
    %671 = vmatmul.mubr.f32.gmra.mrb[0].mxu0 %v604
    %v672 = vpop.f32.mrb[0].mxu0
    %v673 = vadd.f32 %v602, %v672
    %v674 = vpop.f32.mrb[0].mxu0
    %675 = vdwg.mxu0
    %v676 = vld [vmem:[#allocation5 + $0x130] sm:$0xff]
    %v677 = vld [vmem:[#allocation5 + $0x138] sm:$0xff]
    %v678 = vld [vmem:[#allocation5 + $0x140] sm:$0xff]
    %v679 = vld [vmem:[#allocation5 + $0x148] sm:$0xff]
    %v680 = vld [vmem:[#allocation5 + $0x150] sm:$0xff]
    %v681 = vld [vmem:[#allocation5 + $0x158] sm:$0xff]
    %v682 = vld [vmem:[%s3 + $0x7] sm:$0x1]
    %v683 = vlaneseq
    %v684 = vshrl.u32 %v683, 7
    %v685 = vsub.s32 0, %v684
    %v686 = vrot.slane %v682, %v685
    %vm687 = vcmask 392192
    %v689 = vsel %vm687, %v673, 0
    %691 = vmatprep.subr.mxu0 0.0
    %692 = vmatpush1.msra.mxu0 %v676
    %693 = vmatprep.subr.mxu0 0.0
    %694 = vmatpush1.msra.mxu0 %v677
    %695 = vmatprep.subr.mxu0 0.0
    %696 = vmatpush1.msra.mxu0 %v678
    %697 = vmatprep.subr.mxu0 0.0
    %698 = vmatpush1.msra.mxu0 %v679
    %699 = vmatprep.subr.mxu0 0.0
    %700 = vmatpush1.msra.mxu0 %v680
    %701 = vmatprep.subr.mxu0 0.0
    %702 = vmatpush1.msra.mxu0 %v681
    %703 = vmatprep.subr.mxu0 0.0
    %704 = vmatpush1.msra.mxu0 0.0
    %705 = vmatprep.subr.mxu0 0.0
    %706 = vmatpush1.msra.mxu0 0.0
    %707 = vmatprep.subr.mxu0 0.0
    %708 = vmatpush1.msra.mxu0 0.0
    %709 = vmatprep.subr.mxu0 0.0
    %710 = vmatpush1.msra.mxu0 0.0
    %711 = vmatprep.subr.mxu0 0.0
    %712 = vmatpush1.msra.mxu0 0.0
    %713 = vmatprep.subr.mxu0 0.0
    %714 = vmatpush1.msra.mxu0 0.0
    %715 = vmatprep.subr.mxu0 0.0
    %716 = vmatpush1.msra.mxu0 0.0
    %717 = vmatprep.subr.mxu0 0.0
    %718 = vmatpush1.msra.mxu0 0.0
    %719 = vmatprep.subr.mxu0 0.0
    %720 = vmatpush1.msra.mxu0 0.0
    %721 = vmatprep.subr.mxu0 0.0
    %722 = vmatpush1.msra.mxu0 0.0
    %723 = vmatprep.subr.mxu0 0.0
    %724 = vmatpush1.msra.mxu0 0.0
    %725 = vmatprep.subr.mxu0 0.0
    %726 = vmatpush1.msra.mxu0 0.0
    %727 = vmatprep.subr.mxu0 0.0
    %728 = vmatpush1.msra.mxu0 0.0
    %729 = vmatprep.subr.mxu0 0.0
    %730 = vmatpush1.msra.mxu0 0.0
    %731 = vmatprep.subr.mxu0 0.0
    %732 = vmatpush1.msra.mxu0 0.0
    %733 = vmatprep.subr.mxu0 0.0
    %734 = vmatpush1.msra.mxu0 0.0
    %735 = vmatprep.subr.mxu0 0.0
    %736 = vmatpush1.msra.mxu0 0.0
    %737 = vmatprep.subr.mxu0 0.0
    %738 = vmatpush1.msra.mxu0 0.0
    %739 = vmatprep.subr.mxu0 0.0
    %740 = vmatpush1.msra.mxu0 0.0
    %741 = vmatprep.subr.mxu0 0.0
    %742 = vmatpush1.msra.mxu0 0.0
    %743 = vmatprep.subr.mxu0 0.0
    %744 = vmatpush1.msra.mxu0 0.0
    %745 = vmatprep.subr.mxu0 0.0
    %746 = vmatpush1.msra.mxu0 0.0
    %747 = vmatprep.subr.mxu0 0.0
    %748 = vmatpush1.msra.mxu0 0.0
    %749 = vmatprep.subr.mxu0 0.0
    %750 = vmatpush1.msra.mxu0 0.0
    %751 = vmatprep.subr.mxu0 0.0
    %752 = vmatpush1.msra.mxu0 0.0
    %753 = vmatprep.subr.mxu0 0.0
    %754 = vmatpush1.msra.mxu0 0.0
    %755 = vmatprep.mubr.f32.mxu0 0.0
    %756 = vmatmul.mubr.f32.gmra.mrb[0].mxu0 %v689
    %v757 = vpop.f32.mrb[0].mxu0
    %v758 = vadd.f32 %v686, %v757
    %v759 = vpop.f32.mrb[0].mxu0
    %760 = vdwg.mxu0
    %v761 = vmax.f32 %v758, 0.0
    %v762 = vand.u32 2147483647, %v758
    %v763 = vsub.f32 0.0, %v762
    %v764 = vmul.f32 %v763, 1.442695
    %v765 = vpow.pop %v764
    %v766 = vadd.f32 %v765, 1.0
    %v767 = vlog2.pop %v766
    %v768 = vmul.f32 %v767, 0.6931472
    %v769 = vadd.f32 %v761, %v768
    %v770 = vlaneseq
    %v771 = vand.u32 %v770, 127
    %vm772 = vcmp.lt.s32.totalorder %v771, 6
    %v773 = vsel %vm772, %v758, %v769
    %vm774 = vcmp.ge.s32.totalorder %v771, 12
    %vm775 = vcmp.lt.s32.totalorder %v771, 18
    %vm776 = vmand %vm774, %vm775
    %v777 = vadd.f32 %v773, 1.0
    %v778 = vsel %vm776, %v777, %v773
    %vm779 = vcmask 189440
    %780 = vst.msk [vmem:[#allocation7] sm:$0x3] %vm779, %v778
    // Predicated region
    $region26: #{tpu_custom_call.1} parent=1 // pred_check
      _
    $region27: #{tpu_custom_call.1} parent=1 // pred_check_branch
      %782 = sbr.rel (0) target = $region29
    $region28: #{tpu_custom_call.1} parent=1 // pred_region
      %s784 = ssub.s32 32, 32
      %785 = vsyncadd [#allocation4], %s784
      %s787 = sshll.u32 [#allocation7], 4
      %s788 = int_to_ptr.vmem [resolvable:$true] %s787
      %790 = dma.vmem_to_hbm [thread:$0]  %s788, 32, %s4, [#allocation4]
    $region29: #{tpu_custom_call.1} parent=1 // pred_fallthru
      _
    // Predicated region
    $region30: #{tpu_custom_call.1} parent=1 // pred_check
      _
    $region31: #{tpu_custom_call.1} parent=1 // pred_check_branch
      %792 = sbr.rel (0) target = $region33
    $region32: #{tpu_custom_call.1} parent=1 // pred_region
      %793 = dma.done [#allocation4], 32
    $region33: #{tpu_custom_call.1} parent=1 // pred_fallthru
      _
    %794 = vsyncpa [#allocation3], 1
    %795 = vsyncpa [#allocation6], 1
    %796 = vsyncpa [#allocation4], 1

</llo_original>
